<compile_context>
chip_gen: v5e
topology: v5e:2x2
jax: 0.10.0
libtpu: 0.0.40
codegen_flags: <defaults>
</compile_context>

<pallas_src>
import math

import jax
import jax.numpy as jnp
from jax import lax
from jax.experimental import pallas as pl
from jax.experimental.pallas import tpu as pltpu

# ----------------------------- configuration --------------------------------
EMBED_DIM = 32          # embed_dim
NUM_CLASSES = 16        # num_classes
NUM_QUERIES = 16        # num_queries
NUM_DEC_LAYERS = 3      # transformer.decoder.num_layers
NUM_LEVELS = 2          # multi-scale feature levels from the neck
BATCH = 2
IMG_C, IMG_H, IMG_W = 3, 32, 32

LANES = 128                           # lane-dense slab width
CLS_OFF = 0                           # cls logits at lanes [0, NUM_CLASSES)
COORD_OFF = NUM_CLASSES               # coord at lanes [16, 20)
H1_OFF = NUM_CLASSES                  # bbox hidden-1 at lanes [16, 48) of stage-A slab
ONES_LANE = NUM_CLASSES + EMBED_DIM   # lane 48 = constant-one column (bias folding)


# ------------------------------ Pallas kernel --------------------------------
def _head_kernel(x_ref, ref_ref, wA_ref, bA_ref, w2p_ref, w3p_ref, out_ref):
    """Single-block fused head over all (layer, batch, query) rows.

    x_ref   : (M, D)      decoder hidden states, M = L*B*Q rows
    ref_ref : (M, 128)    packed slab: reference(x,y) at lanes [16,18) plus
                          bbox layer-3 bias at lanes [16,20); 0 elsewhere
    wA_ref  : (D, 128)    [class_embed W | bbox layer-1 W | 0]  (cols 0..15 | 16..47)
    bA_ref  : (1, 128)    [class bias | layer-1 bias | 1.0 at lane 48 | 0]
    w2p_ref : (128, D)    bbox layer-2 W at rows 16..47, layer-2 bias at row 48
    w3p_ref : (D, 128)    bbox layer-3 W at cols 16..19, 0 elsewhere
    out_ref : (M, 128)    lane-dense output: cls at [0,16), coord_unact at [16,20)
    """
    x = x_ref[...]                                                    # (M, D)

    # Stage A: fused class_embed + bbox layer 1  -> (M, 128)
    zA = jnp.dot(x, wA_ref[...], preferred_element_type=jnp.float32) + bA_ref[...]
    hA = jnp.maximum(zA, 0.0)          # relu; lane 48 becomes the constant 1.0

    # Stage B: bbox layer 2 (bias folded into ones-lane row) + relu -> (M, D)
    h2 = jnp.maximum(
        jnp.dot(hA, w2p_ref[...], preferred_element_type=jnp.float32), 0.0)

    # Stage C: bbox layer 3, result lands directly at coord lanes -> (M, 128)
    coord = jnp.dot(h2, w3p_ref[...], preferred_element_type=jnp.float32)

    # keep only the class lanes of zA (pre-relu) for the output slab
    lane = lax.broadcasted_iota(jnp.int32, zA.shape, 1)
    cls_part = jnp.where(lane < NUM_CLASSES, zA, 0.0)

    # ref_ref already carries (reference add + layer-3 bias) at the coord lanes
    out_ref[...] = cls_part + coord + ref_ref[...]


def bbox_head_pallas(states, refs, params):
    """states: (M, D) f32; refs: (M, 2) f32. Returns (cls (M,C), coord (M,4))."""
    M, D = states.shape
    C = NUM_CLASSES

    # ---- pack weights into lane-dense slabs (constant-folds under jit) ----
    wA = jnp.zeros((D, LANES), jnp.float32)
    wA = wA.at[:, CLS_OFF:CLS_OFF + C].set(params["wc"])
    wA = wA.at[:, H1_OFF:H1_OFF + D].set(params["w1"])

    bA = jnp.zeros((1, LANES), jnp.float32)
    bA = bA.at[:, CLS_OFF:CLS_OFF + C].set(params["bc"])
    bA = bA.at[:, H1_OFF:H1_OFF + D].set(params["b1"])
    bA = bA.at[:, ONES_LANE].set(1.0)                 # ones-column for bias folding

    w2p = jnp.zeros((LANES, D), jnp.float32)
    w2p = w2p.at[H1_OFF:H1_OFF + D, :].set(params["w2"])
    w2p = w2p.at[ONES_LANE, :].set(params["b2"][0])   # layer-2 bias folded in

    w3p = jnp.zeros((D, LANES), jnp.float32)
    w3p = w3p.at[:, COORD_OFF:COORD_OFF + 4].set(params["w3"])

    # add_tmp2 reference + layer-3 bias pre-packed into one (M, 128) slab
    ref_slab = jnp.zeros((M, LANES), jnp.float32)
    ref_slab = ref_slab.at[:, COORD_OFF:COORD_OFF + 2].set(refs)
    ref_slab = ref_slab.at[:, COORD_OFF:COORD_OFF + 4].add(params["b3"])

    def full(shape):
        return pl.BlockSpec(shape, lambda i: (0, 0))

    out = pl.pallas_call(
        _head_kernel,
        out_shape=jax.ShapeDtypeStruct((M, LANES), jnp.float32),
        grid=(1,),                                    # single resident block
        in_specs=[
            full((M, D)),        # x
            full((M, LANES)),    # ref slab
            full((D, LANES)),    # wA
            full((1, LANES)),    # bA
            full((LANES, D)),    # w2p
            full((D, LANES)),    # w3p
        ],
        out_specs=full((M, LANES)),
        compiler_params=pltpu.CompilerParams(
            dimension_semantics=("arbitrary",)),      # single step, single TC
    )(states, ref_slab, wA, bA, w2p, w3p)

    cls = out[:, CLS_OFF:CLS_OFF + C]
    coord = out[:, COORD_OFF:COORD_OFF + 4]
    return cls, coord


# --------------------------- parameter construction --------------------------
def init_params(key):
    ks = jax.random.split(key, 8)
    prior_prob = 0.01
    bias_value = -math.log((1.0 - prior_prob) / prior_prob)

    # class_embed: Linear(embed_dim, num_classes); bias = bias_value * ones
    wc = (jax.random.normal(ks[0], (EMBED_DIM, NUM_CLASSES), jnp.float32)
          / math.sqrt(EMBED_DIM))
    bc = jnp.full((1, NUM_CLASSES), bias_value, jnp.float32)

    # bbox_embed: MLP(embed_dim, embed_dim, 4, num_layers=3)
    w1 = (jax.random.normal(ks[1], (EMBED_DIM, EMBED_DIM), jnp.float32)
          / math.sqrt(EMBED_DIM))
    b1 = jax.random.normal(ks[2], (1, EMBED_DIM), jnp.float32) * 0.01
    w2 = (jax.random.normal(ks[3], (EMBED_DIM, EMBED_DIM), jnp.float32)
          / math.sqrt(EMBED_DIM))
    b2 = jax.random.normal(ks[4], (1, EMBED_DIM), jnp.float32) * 0.01
    # _build_head: last layer weight = 0, bias = 0 with bias[2:] = -2.0
    w3 = jnp.zeros((EMBED_DIM, 4), jnp.float32)
    b3 = jnp.array([[0.0, 0.0, -2.0, -2.0]], jnp.float32)

    # query_embedding: nn.Embedding(num_queries, embed_dim * 2)
    query_embedding = jax.random.normal(
        ks[5], (NUM_QUERIES, EMBED_DIM * 2), jnp.float32)

    # stand-in projections for backbone/neck/transformer stubs
    neck_proj = jax.random.normal(ks[6], (IMG_C, EMBED_DIM), jnp.float32) * 0.1
    ref_proj = jax.random.normal(ks[7], (EMBED_DIM, 2), jnp.float32) * 0.1

    return dict(wc=wc, bc=bc, w1=w1, b1=b1, w2=w2, b2=b2, w3=w3, b3=b3,
                query_embedding=query_embedding,
                neck_proj=neck_proj, ref_proj=ref_proj)


# -------------------- upstream stand-ins (glue, plain JAX) -------------------
def sine_position_embedding(mask, num_pos_feats):
    """Standard DETR sine embedding from a (B, H, W) bool mask -> (B, 2F, H, W)."""
    not_mask = 1.0 - mask.astype(jnp.float32)
    y_embed = jnp.cumsum(not_mask, axis=1)
    x_embed = jnp.cumsum(not_mask, axis=2)
    dim_t = jnp.arange(num_pos_feats, dtype=jnp.float32)
    dim_t = 10000.0 ** (2.0 * jnp.floor(dim_t / 2.0) / num_pos_feats)
    pos_x = x_embed[..., None] / dim_t
    pos_y = y_embed[..., None] / dim_t
    pos_x = jnp.concatenate(
        [jnp.sin(pos_x[..., 0::2]), jnp.cos(pos_x[..., 1::2])], axis=-1)
    pos_y = jnp.concatenate(
        [jnp.sin(pos_y[..., 0::2]), jnp.cos(pos_y[..., 1::2])], axis=-1)
    pos = jnp.concatenate([pos_y, pos_x], axis=-1)  # (B, H, W, 2F)
    return jnp.transpose(pos, (0, 3, 1, 2))


def backbone_neck_stub(images, params):
    """# TODO(synk): backbone/neck are injected submodules; deterministic
    avg-pool + 1x1-projection stand-in producing NUM_LEVELS NCHW feature maps."""
    feats = []
    x = images  # (B, C, H, W)
    for lvl in range(NUM_LEVELS):
        stride = 2 ** (lvl + 3)
        B, C, H, W = x.shape
        h, w = H // stride, W // stride
        pooled = x.reshape(B, C, h, stride, w, stride).mean(axis=(3, 5))
        feat = jnp.einsum("bchw,cd->bdhw", pooled, params["neck_proj"])
        feats.append(feat.astype(jnp.float32))
    return feats


def transformer_stub(multi_level_feats, multi_level_masks,
                     multi_level_pos_embeds, query_embeds, params):
    """# TODO(synk): DeformableTransformer is an injected submodule;
    deterministic stand-in producing the outputs DeformableDETR.forward needs."""
    B = multi_level_feats[0].shape[0]
    D = EMBED_DIM
    # flatten memory tokens (B, sum(H*W), D) with pos embeds added
    tokens = []
    for feat, pos in zip(multi_level_feats, multi_level_pos_embeds):
        t = (feat + pos).reshape(B, D, -1).transpose(0, 2, 1)
        tokens.append(t)
    memory = jnp.concatenate(tokens, axis=1)
    mem_pool = memory.mean(axis=1, keepdims=True)  # (B, 1, D)

    # query_embeds: (Q, 2D) -> query_pos, tgt  (as in Deformable-DETR)
    query_pos, tgt = jnp.split(query_embeds, 2, axis=1)      # (Q, D) each
    init_reference_unact = query_pos @ params["ref_proj"]    # (Q, 2)
    init_reference_unact = jnp.broadcast_to(
        init_reference_unact[None], (B, NUM_QUERIES, 2))

    inter_states = []
    inter_references_unact = []
    hs = jnp.broadcast_to(tgt[None], (B, NUM_QUERIES, D)) + query_pos[None]
    for lyr in range(NUM_DEC_LAYERS):
        hs = jnp.tanh(hs + 0.1 * (lyr + 1) * mem_pool)
        inter_states.append(hs)
        # no box refinement in decoder -> references stay at init
        inter_references_unact.append(init_reference_unact)
    inter_bbox_out = [None] * NUM_DEC_LAYERS  # unused (with_box_refine=False)
    enc_outputs_class = None                  # unused (as_two_stage=False)
    enc_outputs_coord_unact = None
    return (inter_states, inter_bbox_out, init_reference_unact,
            inter_references_unact, enc_outputs_class, enc_outputs_coord_unact)


# ------------------------------ full forward ---------------------------------
def deformable_detr_forward(batched_inputs, params):
    """Eval-mode forward; returns (box_cls, box_pred) of the last decoder layer.

    Note: matches the module's eval path which returns outputs_coord_unact
    (no sigmoid applied by DeformableDETR itself in inference)."""
    images = batched_inputs["img"]  # (B, 3, H, W) NCHW
    B = images.shape[0]

    # backbone + neck
    multi_level_feats = backbone_neck_stub(images, params)

    # gen_img_masks (eval): all-zero masks; interpolate (nearest) to feat sizes
    img_masks = jnp.zeros((B, IMG_H, IMG_W), jnp.float32)
    multi_level_masks, multi_level_pos = [], []
    for feat in multi_level_feats:
        h, w = feat.shape[-2:]
        m = jax.image.resize(img_masks, (B, h, w), method="nearest") > 0.5
        multi_level_masks.append(m)
        multi_level_pos.append(sine_position_embedding(m, EMBED_DIM // 2))

    query_embeds = params["query_embedding"]  # not as_two_stage

    (inter_states, _inter_bbox_out, init_reference_unact,
     inter_references_unact, _enc_cls, _enc_coord) = transformer_stub(
        multi_level_feats, multi_level_masks, multi_level_pos,
        query_embeds, params)

    # ---- bbox_head: the Pallas hot path (single fused block) ----
    L = NUM_DEC_LAYERS
    R = B * NUM_QUERIES
    # flatten all decoder layers' rows into one (L*R, D) slab
    states = jnp.concatenate(
        [s.reshape(R, EMBED_DIM) for s in inter_states], axis=0)     # (L*R, D)
    refs_per_layer = [init_reference_unact] + list(inter_references_unact[:-1])
    refs = jnp.concatenate(
        [r.reshape(R, 2) for r in refs_per_layer], axis=0)           # (L*R, 2)

    cls_flat, coord_flat = bbox_head_pallas(states, refs, params)

    outputs_classes = cls_flat.reshape(L, B, NUM_QUERIES, NUM_CLASSES)
    outputs_coords = coord_flat.reshape(L, B, NUM_QUERIES, 4)

    # _post_process (eval, no post_process module): last-layer logits & coords
    box_cls = outputs_classes[-1]
    box_pred = outputs_coords[-1]
    return box_cls, box_pred, states, refs


# ------------------------------ reference check ------------------------------
def bbox_head_reference(states, refs, params):
    cls = states @ params["wc"] + params["bc"]
    h = jnp.maximum(states @ params["w1"] + params["b1"], 0.0)
    h = jnp.maximum(h @ params["w2"] + params["b2"], 0.0)
    tmp = h @ params["w3"] + params["b3"]
    coord = jnp.concatenate([tmp[:, :2] + refs, tmp[:, 2:]], axis=-1)  # add_tmp2
    return cls, coord


if __name__ == "__main__":
    key = jax.random.PRNGKey(0)
    pkey, ikey = jax.random.split(key)
    params = init_params(pkey)

    images = jax.random.normal(ikey, (BATCH, IMG_C, IMG_H, IMG_W), jnp.float32)
    batched_inputs = {"img": images}

    box_cls, box_pred, states, refs = deformable_detr_forward(
        batched_inputs, params)
    jax.block_until_ready((box_cls, box_pred))

    # correctness check against plain-JAX reference of the head (model init)
    ref_cls, ref_coord = bbox_head_reference(states, refs, params)
    L, R = NUM_DEC_LAYERS, BATCH * NUM_QUERIES
    ref_cls = ref_cls.reshape(L, BATCH, NUM_QUERIES, NUM_CLASSES)[-1]
    ref_coord = ref_coord.reshape(L, BATCH, NUM_QUERIES, 4)[-1]
    assert box_cls.shape == (BATCH, NUM_QUERIES, NUM_CLASSES)
    assert box_pred.shape == (BATCH, NUM_QUERIES, 4)
    assert jnp.allclose(box_cls, ref_cls, atol=1e-5)
    assert jnp.allclose(box_pred, ref_coord, atol=1e-5)

    # randomized head check (non-zero layer-3 weights) exercises the whole
    # packed data path including the ones-column bias folding
    rk = jax.random.split(jax.random.PRNGKey(1), 10)
    M = L * R
    tparams = dict(
        wc=jax.random.normal(rk[0], (EMBED_DIM, NUM_CLASSES), jnp.float32) * 0.3,
        bc=jax.random.normal(rk[1], (1, NUM_CLASSES), jnp.float32),
        w1=jax.random.normal(rk[2], (EMBED_DIM, EMBED_DIM), jnp.float32) * 0.2,
        b1=jax.random.normal(rk[3], (1, EMBED_DIM), jnp.float32),
        w2=jax.random.normal(rk[4], (EMBED_DIM, EMBED_DIM), jnp.float32) * 0.2,
        b2=jax.random.normal(rk[5], (1, EMBED_DIM), jnp.float32),
        w3=jax.random.normal(rk[6], (EMBED_DIM, 4), jnp.float32) * 0.2,
        b3=jax.random.normal(rk[7], (1, 4), jnp.float32),
    )
    ts = jax.random.normal(rk[8], (M, EMBED_DIM), jnp.float32)
    tr = jax.random.normal(rk[9], (M, 2), jnp.float32)
    k_cls, k_coord = bbox_head_pallas(ts, tr, tparams)
    r_cls, r_coord = bbox_head_reference(ts, tr, tparams)
    jax.block_until_ready((k_cls, k_coord))
    assert jnp.allclose(k_cls, r_cls, atol=1e-4, rtol=1e-4)
    assert jnp.allclose(k_coord, r_coord, atol=1e-4, rtol=1e-4)

    print("KERNEL_OK")
</pallas_src>

<mosaic_0001>
module attributes {stable_mosaic.version = 11 : i64} {
  func.func @_head_kernel(%arg0: i32, %arg1: memref<96x32xf32, #tpu.memory_space<vmem>>, %arg2: memref<96x128xf32, #tpu.memory_space<vmem>>, %arg3: memref<32x128xf32, #tpu.memory_space<vmem>>, %arg4: memref<1x128xf32, #tpu.memory_space<vmem>>, %arg5: memref<128x32xf32, #tpu.memory_space<vmem>>, %arg6: memref<32x128xf32, #tpu.memory_space<vmem>>, %arg7: memref<96x128xf32, #tpu.memory_space<vmem>>) attributes {dimension_semantics = [#tpu.dimension_semantics<arbitrary>], iteration_bounds = array<i64: 1>, scalar_prefetch = 0 : i64, scratch_operands = 0 : i64, tpu.core_type = #tpu.core_type<tc>, window_params = [{pipeline_mode = #tpu.pipeline_mode<synchronous>, transform_indices = @transform_0, window_bounds = array<i64: 96, 32>}, {pipeline_mode = #tpu.pipeline_mode<synchronous>, transform_indices = @transform_1, window_bounds = array<i64: 96, 128>}, {pipeline_mode = #tpu.pipeline_mode<synchronous>, transform_indices = @transform_2, window_bounds = array<i64: 32, 128>}, {pipeline_mode = #tpu.pipeline_mode<synchronous>, transform_indices = @transform_3, window_bounds = array<i64: 1, 128>}, {pipeline_mode = #tpu.pipeline_mode<synchronous>, transform_indices = @transform_4, window_bounds = array<i64: 128, 32>}, {pipeline_mode = #tpu.pipeline_mode<synchronous>, transform_indices = @transform_5, window_bounds = array<i64: 32, 128>}, {pipeline_mode = #tpu.pipeline_mode<synchronous>, transform_indices = @transform_6, window_bounds = array<i64: 96, 128>}]} {
    %c0 = arith.constant 0 : index
    %c0_0 = arith.constant 0 : index
    %0 = vector.load %arg1[%c0, %c0_0] : memref<96x32xf32, #tpu.memory_space<vmem>>, vector<96x32xf32>
    %c0_1 = arith.constant 0 : index
    %c0_2 = arith.constant 0 : index
    %1 = vector.load %arg3[%c0_1, %c0_2] : memref<32x128xf32, #tpu.memory_space<vmem>>, vector<32x128xf32>
    %cst = arith.constant dense<0.000000e+00> : vector<96x128xf32>
    %2 = tpu.matmul %0, %1, %cst {dimension_numbers = #tpu.dot_dimension_numbers<[1], [0], [0], [1], [0, 0, 1, 1], [], []>} : vector<96x32xf32>, vector<32x128xf32>, vector<96x128xf32> -> vector<96x128xf32>
    %c0_3 = arith.constant 0 : index
    %c0_4 = arith.constant 0 : index
    %3 = vector.load %arg4[%c0_3, %c0_4] : memref<1x128xf32, #tpu.memory_space<vmem>>, vector<1x128xf32>
    %4 = vector.broadcast %3 : vector<1x128xf32> to vector<96x128xf32>
    %5 = arith.addf %2, %4 : vector<96x128xf32>
    %cst_5 = arith.constant 0.000000e+00 : f32
    %6 = vector.broadcast %cst_5 : f32 to vector<96x128xf32>
    %7 = arith.maximumf %5, %6 : vector<96x128xf32>
    %c0_6 = arith.constant 0 : index
    %c0_7 = arith.constant 0 : index
    %8 = vector.load %arg5[%c0_6, %c0_7] : memref<128x32xf32, #tpu.memory_space<vmem>>, vector<128x32xf32>
    %cst_8 = arith.constant dense<0.000000e+00> : vector<96x32xf32>
    %9 = tpu.matmul %7, %8, %cst_8 {dimension_numbers = #tpu.dot_dimension_numbers<[1], [0], [0], [1], [0, 0, 1, 1], [], []>} : vector<96x128xf32>, vector<128x32xf32>, vector<96x32xf32> -> vector<96x32xf32>
    %cst_9 = arith.constant 0.000000e+00 : f32
    %10 = vector.broadcast %cst_9 : f32 to vector<96x32xf32>
    %11 = arith.maximumf %9, %10 : vector<96x32xf32>
    %c0_10 = arith.constant 0 : index
    %c0_11 = arith.constant 0 : index
    %12 = vector.load %arg6[%c0_10, %c0_11] : memref<32x128xf32, #tpu.memory_space<vmem>>, vector<32x128xf32>
    %cst_12 = arith.constant dense<0.000000e+00> : vector<96x128xf32>
    %13 = tpu.matmul %11, %12, %cst_12 {dimension_numbers = #tpu.dot_dimension_numbers<[1], [0], [0], [1], [0, 0, 1, 1], [], []>} : vector<96x32xf32>, vector<32x128xf32>, vector<96x128xf32> -> vector<96x128xf32>
    %14 = tpu.iota {dimensions = array<i32: 1>} : vector<96x128xi32>
    %c16_i32 = arith.constant 16 : i32
    %15 = vector.broadcast %c16_i32 : i32 to vector<96x128xi32>
    %16 = arith.cmpi slt, %14, %15 : vector<96x128xi32>
    %cst_13 = arith.constant 0.000000e+00 : f32
    %17 = vector.broadcast %cst_13 : f32 to vector<96x128xf32>
    %18 = arith.select %16, %5, %17 : vector<96x128xi1>, vector<96x128xf32>
    %19 = arith.addf %18, %13 : vector<96x128xf32>
    %c0_14 = arith.constant 0 : index
    %c0_15 = arith.constant 0 : index
    %20 = vector.load %arg2[%c0_14, %c0_15] : memref<96x128xf32, #tpu.memory_space<vmem>>, vector<96x128xf32>
    %21 = arith.addf %19, %20 : vector<96x128xf32>
    %c0_16 = arith.constant 0 : index
    %c0_17 = arith.constant 0 : index
    %22 = vector.load %arg7[%c0_16, %c0_17] : memref<96x128xf32, #tpu.memory_space<vmem>>, vector<96x128xf32>
    tpu.vector_store %arg7[%c0_16, %c0_17], %21 {strides = array<i32>} : memref<96x128xf32, #tpu.memory_space<vmem>>, vector<96x128xf32>,
    return
  }
  func.func @transform_0(%arg0: i32) -> (i32, i32) {
    %c0_i32 = arith.constant 0 : i32
    %c0_i32_0 = arith.constant 0 : i32
    %c0_i32_1 = arith.constant 0 : i32
    return %c0_i32, %c0_i32_0 : i32, i32
  }
  func.func @transform_1(%arg0: i32) -> (i32, i32) {
    %c0_i32 = arith.constant 0 : i32
    %c0_i32_0 = arith.constant 0 : i32
    %c0_i32_1 = arith.constant 0 : i32
    return %c0_i32, %c0_i32_0 : i32, i32
  }
  func.func @transform_2(%arg0: i32) -> (i32, i32) {
    %c0_i32 = arith.constant 0 : i32
    %c0_i32_0 = arith.constant 0 : i32
    %c0_i32_1 = arith.constant 0 : i32
    return %c0_i32, %c0_i32_0 : i32, i32
  }
  func.func @transform_3(%arg0: i32) -> (i32, i32) {
    %c0_i32 = arith.constant 0 : i32
    %c0_i32_0 = arith.constant 0 : i32
    %c0_i32_1 = arith.constant 0 : i32
    return %c0_i32, %c0_i32_0 : i32, i32
  }
  func.func @transform_4(%arg0: i32) -> (i32, i32) {
    %c0_i32 = arith.constant 0 : i32
    %c0_i32_0 = arith.constant 0 : i32
    %c0_i32_1 = arith.constant 0 : i32
    return %c0_i32, %c0_i32_0 : i32, i32
  }
  func.func @transform_5(%arg0: i32) -> (i32, i32) {
    %c0_i32 = arith.constant 0 : i32
    %c0_i32_0 = arith.constant 0 : i32
    %c0_i32_1 = arith.constant 0 : i32
    return %c0_i32, %c0_i32_0 : i32, i32
  }
  func.func @transform_6(%arg0: i32) -> (i32, i32) {
    %c0_i32 = arith.constant 0 : i32
    %c0_i32_0 = arith.constant 0 : i32
    %c0_i32_1 = arith.constant 0 : i32
    return %c0_i32, %c0_i32_0 : i32, i32
  }
}

</mosaic_0001>

<llo_original>
// kernel: tpu_custom_call.1
$region0: #{tpu_custom_call.1}
  #allocation0 [shape = 'u32[]', space=smem, size = 0x4, offset = 0x4, fixed_abs, tag = 'smem constant byte address 0x4 - core index']
  #allocation1 [shape = 'u32[72,128]{1,0:T(1,128)}', space=vmem, size = 0x9000, scoped, tag = 'internal scratch']
  %s0 = inlined_call_operand.vmem [shape: f32[96,32], index: 0, kind: input, shape index: {}]
  %s1 = inlined_call_operand.vmem [shape: f32[96,128], index: 1, kind: input, shape index: {}]
  %s2 = inlined_call_operand.vmem [shape: f32[32,128], index: 2, kind: input, shape index: {}]
  %s3 = inlined_call_operand.vmem [shape: f32[1,128], index: 3, kind: input, shape index: {}]
  %s4 = inlined_call_operand.vmem [shape: f32[128,32], index: 4, kind: input, shape index: {}]
  %s5 = inlined_call_operand.vmem [shape: f32[32,128], index: 5, kind: input, shape index: {}]
  %s6 = inlined_call_operand.hbm [shape: f32[96,128], index: 6, kind: output, shape index: {}]
  %s7 = sld [smem:[#allocation0]]
  $region34: #{tpu_custom_call.1} parent=0
    _
  %s9 = ssub.s32 1, %s7
  %s10 = scalar_select 0, %s9, %s7
  $region1: #{tpu_custom_call.1} parent=0
    #allocation2 [shape = 'u8[49152]{0}', space=vmem, size = 0xc000, scoped, tag = 'output window, operand 0, single buffered']
    #allocation3 [shape = 's32[1]{0}', space=sflag, size = 0x4, scoped, tag = 'scoped memory for tpu_custom_call.1']
    %11 = vsyncpa [#allocation3], 0
    // Predicated region
    $region2: #{tpu_custom_call.1} parent=1 // pred_check
      _
    $region3: #{tpu_custom_call.1} parent=1 // pred_check_branch
      %13 = sbr.rel (0) target = $region5
    $region4: #{tpu_custom_call.1} parent=1 // pred_region
      _
    $region5: #{tpu_custom_call.1} parent=1 // pred_fallthru
      _
    // Predicated region
    $region6: #{tpu_custom_call.1} parent=1 // pred_check
      _
    $region7: #{tpu_custom_call.1} parent=1 // pred_check_branch
      %15 = sbr.rel (0) target = $region9
    $region8: #{tpu_custom_call.1} parent=1 // pred_region
      _
    $region9: #{tpu_custom_call.1} parent=1 // pred_fallthru
      _
    // Predicated region
    $region10: #{tpu_custom_call.1} parent=1 // pred_check
      _
    $region11: #{tpu_custom_call.1} parent=1 // pred_check_branch
      %17 = sbr.rel (0) target = $region13
    $region12: #{tpu_custom_call.1} parent=1 // pred_region
      _
    $region13: #{tpu_custom_call.1} parent=1 // pred_fallthru
      _
    // Predicated region
    $region14: #{tpu_custom_call.1} parent=1 // pred_check
      _
    $region15: #{tpu_custom_call.1} parent=1 // pred_check_branch
      %19 = sbr.rel (0) target = $region17
    $region16: #{tpu_custom_call.1} parent=1 // pred_region
      _
    $region17: #{tpu_custom_call.1} parent=1 // pred_fallthru
      _
    // Predicated region
    $region18: #{tpu_custom_call.1} parent=1 // pred_check
      _
    $region19: #{tpu_custom_call.1} parent=1 // pred_check_branch
      %21 = sbr.rel (0) target = $region21
    $region20: #{tpu_custom_call.1} parent=1 // pred_region
      _
    $region21: #{tpu_custom_call.1} parent=1 // pred_fallthru
      _
    // Predicated region
    $region22: #{tpu_custom_call.1} parent=1 // pred_check
      _
    $region23: #{tpu_custom_call.1} parent=1 // pred_check_branch
      %23 = sbr.rel (0) target = $region25
    $region24: #{tpu_custom_call.1} parent=1 // pred_region
      _
    $region25: #{tpu_custom_call.1} parent=1 // pred_fallthru
      _
    %v24 = vld [vmem:[%s0] sm:$0xff]
    %v25 = vld [vmem:[%s0 + $0x8] sm:$0xff]
    %v26 = vld [vmem:[%s0 + $0x10] sm:$0xff]
    %v27 = vld [vmem:[%s0 + $0x18] sm:$0xff]
    %v28 = vld [vmem:[%s0 + $0x20] sm:$0xff]
    %v29 = vld [vmem:[%s0 + $0x28] sm:$0xff]
    %v30 = vld [vmem:[%s0 + $0x30] sm:$0xff]
    %v31 = vld [vmem:[%s0 + $0x38] sm:$0xff]
    %v32 = vld [vmem:[%s0 + $0x40] sm:$0xff]
    %v33 = vld [vmem:[%s0 + $0x48] sm:$0xff]
    %v34 = vld [vmem:[%s0 + $0x50] sm:$0xff]
    %v35 = vld [vmem:[%s0 + $0x58] sm:$0xff]
    %v36 = vld [vmem:[%s2] sm:$0xff]
    %v37 = vld [vmem:[%s2 + $0x8] sm:$0xff]
    %v38 = vld [vmem:[%s2 + $0x10] sm:$0xff]
    %v39 = vld [vmem:[%s2 + $0x18] sm:$0xff]
    %v40 = vld [vmem:[%s3] sm:$0x1]
    %v42 = vperm.slane %v40, 0
    %vm44 = vcmask 261120
    %v46 = vsel %vm44, %v24, 0
    %v49 = vsel %vm44, %v25, 0
    %v52 = vsel %vm44, %v26, 0
    %v55 = vsel %vm44, %v27, 0
    %v58 = vsel %vm44, %v28, 0
    %v61 = vsel %vm44, %v29, 0
    %v64 = vsel %vm44, %v30, 0
    %v67 = vsel %vm44, %v31, 0
    %v70 = vsel %vm44, %v32, 0
    %v73 = vsel %vm44, %v33, 0
    %v76 = vsel %vm44, %v34, 0
    %v79 = vsel %vm44, %v35, 0
    %81 = vmatpush.msra.mxu0 0.0
    %82 = vmatpush.msra.mxu0 0.0
    %83 = vmatpush.msra.mxu0 0.0
    %84 = vmatpush.msra.mxu0 0.0
    %85 = vmatpush.msra.mxu0 0.0
    %86 = vmatpush.msra.mxu0 0.0
    %87 = vmatpush.msra.mxu0 0.0
    %88 = vmatpush.msra.mxu0 0.0
    %89 = vmatpush.msra.mxu0 0.0
    %90 = vmatpush.msra.mxu0 0.0
    %91 = vmatpush.msra.mxu0 0.0
    %92 = vmatpush.msra.mxu0 0.0
    %93 = vmatpush.msra.mxu0 %v39
    %94 = vmatpush.msra.mxu0 %v38
    %95 = vmatpush.msra.mxu0 %v37
    %96 = vmatpush.msra.mxu0 %v36
    %97 = vmatmul.f32.gmra.mxu0 %v46
    %v98 = vpop.f32.mrf.mxu0
    %v99 = vadd.f32 %v42, %v98
    %100 = vmatmul.f32.gmra.mxu0 %v49
    %v101 = vpop.f32.mrf.mxu0
    %v102 = vadd.f32 %v42, %v101
    %103 = vmatmul.f32.gmra.mxu0 %v52
    %v104 = vpop.f32.mrf.mxu0
    %v105 = vadd.f32 %v42, %v104
    %106 = vmatmul.f32.gmra.mxu0 %v55
    %v107 = vpop.f32.mrf.mxu0
    %v108 = vadd.f32 %v42, %v107
    %109 = vmatmul.f32.gmra.mxu0 %v58
    %v110 = vpop.f32.mrf.mxu0
    %v111 = vadd.f32 %v42, %v110
    %112 = vmatmul.f32.gmra.mxu0 %v61
    %v113 = vpop.f32.mrf.mxu0
    %v114 = vadd.f32 %v42, %v113
    %115 = vmatmul.f32.gmra.mxu0 %v64
    %v116 = vpop.f32.mrf.mxu0
    %v117 = vadd.f32 %v42, %v116
    %118 = vmatmul.f32.gmra.mxu0 %v67
    %v119 = vpop.f32.mrf.mxu0
    %v120 = vadd.f32 %v42, %v119
    %121 = vmatmul.f32.gmra.mxu0 %v70
    %v122 = vpop.f32.mrf.mxu0
    %v123 = vadd.f32 %v42, %v122
    %124 = vmatmul.f32.gmra.mxu0 %v73
    %v125 = vpop.f32.mrf.mxu0
    %v126 = vadd.f32 %v42, %v125
    %127 = vmatmul.f32.gmra.mxu0 %v76
    %v128 = vpop.f32.mrf.mxu0
    %v129 = vadd.f32 %v42, %v128
    %130 = vmatmul.f32.gmra.mxu0 %v79
    %v131 = vpop.f32.mrf.mxu0
    %v132 = vadd.f32 %v42, %v131
    %133 = vdwg.mxu0
    %v134 = vmax.f32 %v99, 0.0
    %v135 = vmax.f32 %v102, 0.0
    %v136 = vmax.f32 %v105, 0.0
    %v137 = vmax.f32 %v108, 0.0
    %v138 = vmax.f32 %v111, 0.0
    %v139 = vmax.f32 %v114, 0.0
    %v140 = vmax.f32 %v117, 0.0
    %v141 = vmax.f32 %v120, 0.0
    %v142 = vmax.f32 %v123, 0.0
    %v143 = vmax.f32 %v126, 0.0
    %v144 = vmax.f32 %v129, 0.0
    %v145 = vmax.f32 %v132, 0.0
    %v146 = vld [vmem:[%s4] sm:$0xff]
    %v147 = vld [vmem:[%s4 + $0x8] sm:$0xff]
    %v148 = vld [vmem:[%s4 + $0x10] sm:$0xff]
    %v149 = vld [vmem:[%s4 + $0x18] sm:$0xff]
    %v150 = vld [vmem:[%s4 + $0x20] sm:$0xff]
    %v151 = vld [vmem:[%s4 + $0x28] sm:$0xff]
    %v152 = vld [vmem:[%s4 + $0x30] sm:$0xff]
    %v153 = vld [vmem:[%s4 + $0x38] sm:$0xff]
    %v154 = vld [vmem:[%s4 + $0x40] sm:$0xff]
    %v155 = vld [vmem:[%s4 + $0x48] sm:$0xff]
    %v156 = vld [vmem:[%s4 + $0x50] sm:$0xff]
    %v157 = vld [vmem:[%s4 + $0x58] sm:$0xff]
    %v158 = vld [vmem:[%s4 + $0x60] sm:$0xff]
    %v159 = vld [vmem:[%s4 + $0x68] sm:$0xff]
    %v160 = vld [vmem:[%s4 + $0x70] sm:$0xff]
    %v161 = vld [vmem:[%s4 + $0x78] sm:$0xff]
    %162 = vmatpush.msra.mxu0 %v161
    %163 = vmatpush.msra.mxu0 %v160
    %164 = vmatpush.msra.mxu0 %v159
    %165 = vmatpush.msra.mxu0 %v158
    %166 = vmatpush.msra.mxu0 %v157
    %167 = vmatpush.msra.mxu0 %v156
    %168 = vmatpush.msra.mxu0 %v155
    %169 = vmatpush.msra.mxu0 %v154
    %170 = vmatpush.msra.mxu0 %v153
    %171 = vmatpush.msra.mxu0 %v152
    %172 = vmatpush.msra.mxu0 %v151
    %173 = vmatpush.msra.mxu0 %v150
    %174 = vmatpush.msra.mxu0 %v149
    %175 = vmatpush.msra.mxu0 %v148
    %176 = vmatpush.msra.mxu0 %v147
    %177 = vmatpush.msra.mxu0 %v146
    %178 = vmatmul.f32.gmra.mxu0 %v134
    %v179 = vpop.f32.mrf.mxu0
    %v180 = vadd.f32 0.0, %v179
    %181 = vmatmul.f32.gmra.mxu0 %v135
    %v182 = vpop.f32.mrf.mxu0
    %v183 = vadd.f32 0.0, %v182
    %184 = vmatmul.f32.gmra.mxu0 %v136
    %v185 = vpop.f32.mrf.mxu0
    %v186 = vadd.f32 0.0, %v185
    %187 = vmatmul.f32.gmra.mxu0 %v137
    %v188 = vpop.f32.mrf.mxu0
    %v189 = vadd.f32 0.0, %v188
    %190 = vmatmul.f32.gmra.mxu0 %v138
    %v191 = vpop.f32.mrf.mxu0
    %v192 = vadd.f32 0.0, %v191
    %193 = vmatmul.f32.gmra.mxu0 %v139
    %v194 = vpop.f32.mrf.mxu0
    %v195 = vadd.f32 0.0, %v194
    %196 = vmatmul.f32.gmra.mxu0 %v140
    %v197 = vpop.f32.mrf.mxu0
    %v198 = vadd.f32 0.0, %v197
    %199 = vmatmul.f32.gmra.mxu0 %v141
    %v200 = vpop.f32.mrf.mxu0
    %v201 = vadd.f32 0.0, %v200
    %202 = vmatmul.f32.gmra.mxu0 %v142
    %v203 = vpop.f32.mrf.mxu0
    %v204 = vadd.f32 0.0, %v203
    %205 = vmatmul.f32.gmra.mxu0 %v143
    %v206 = vpop.f32.mrf.mxu0
    %v207 = vadd.f32 0.0, %v206
    %208 = vmatmul.f32.gmra.mxu0 %v144
    %v209 = vpop.f32.mrf.mxu0
    %v210 = vadd.f32 0.0, %v209
    %211 = vmatmul.f32.gmra.mxu0 %v145
    %v212 = vpop.f32.mrf.mxu0
    %v213 = vadd.f32 0.0, %v212
    %214 = vdwg.mxu0
    %v215 = vmax.f32 %v180, 0.0
    %v216 = vmax.f32 %v183, 0.0
    %v217 = vmax.f32 %v186, 0.0
    %v218 = vmax.f32 %v189, 0.0
    %v219 = vmax.f32 %v192, 0.0
    %v220 = vmax.f32 %v195, 0.0
    %v221 = vmax.f32 %v198, 0.0
    %v222 = vmax.f32 %v201, 0.0
    %v223 = vmax.f32 %v204, 0.0
    %v224 = vmax.f32 %v207, 0.0
    %v225 = vmax.f32 %v210, 0.0
    %v226 = vmax.f32 %v213, 0.0
    %v227 = vld [vmem:[%s5] sm:$0xff]
    %v228 = vld [vmem:[%s5 + $0x8] sm:$0xff]
    %v229 = vld [vmem:[%s5 + $0x10] sm:$0xff]
    %v230 = vld [vmem:[%s5 + $0x18] sm:$0xff]
    %v232 = vsel %vm44, %v215, 0
    %v235 = vsel %vm44, %v216, 0
    %v238 = vsel %vm44, %v217, 0
    %v241 = vsel %vm44, %v218, 0
    %v244 = vsel %vm44, %v219, 0
    %v247 = vsel %vm44, %v220, 0
    %v250 = vsel %vm44, %v221, 0
    %v253 = vsel %vm44, %v222, 0
    %v256 = vsel %vm44, %v223, 0
    %v259 = vsel %vm44, %v224, 0
    %v262 = vsel %vm44, %v225, 0
    %v265 = vsel %vm44, %v226, 0
    %267 = vmatpush.msra.mxu0 0.0
    %268 = vmatpush.msra.mxu0 0.0
    %269 = vmatpush.msra.mxu0 0.0
    %270 = vmatpush.msra.mxu0 0.0
    %271 = vmatpush.msra.mxu0 0.0
    %272 = vmatpush.msra.mxu0 0.0
    %273 = vmatpush.msra.mxu0 0.0
    %274 = vmatpush.msra.mxu0 0.0
    %275 = vmatpush.msra.mxu0 0.0
    %276 = vmatpush.msra.mxu0 0.0
    %277 = vmatpush.msra.mxu0 0.0
    %278 = vmatpush.msra.mxu0 0.0
    %279 = vmatpush.msra.mxu0 %v230
    %280 = vmatpush.msra.mxu0 %v229
    %281 = vmatpush.msra.mxu0 %v228
    %282 = vmatpush.msra.mxu0 %v227
    %283 = vmatmul.f32.gmra.mxu0 %v232
    %v284 = vpop.f32.mrf.mxu0
    %v285 = vadd.f32 0.0, %v284
    %286 = vmatmul.f32.gmra.mxu0 %v235
    %v287 = vpop.f32.mrf.mxu0
    %v288 = vadd.f32 0.0, %v287
    %289 = vmatmul.f32.gmra.mxu0 %v238
    %v290 = vpop.f32.mrf.mxu0
    %v291 = vadd.f32 0.0, %v290
    %292 = vmatmul.f32.gmra.mxu0 %v241
    %v293 = vpop.f32.mrf.mxu0
    %v294 = vadd.f32 0.0, %v293
    %295 = vmatmul.f32.gmra.mxu0 %v244
    %v296 = vpop.f32.mrf.mxu0
    %v297 = vadd.f32 0.0, %v296
    %298 = vmatmul.f32.gmra.mxu0 %v247
    %v299 = vpop.f32.mrf.mxu0
    %v300 = vadd.f32 0.0, %v299
    %301 = vmatmul.f32.gmra.mxu0 %v250
    %v302 = vpop.f32.mrf.mxu0
    %v303 = vadd.f32 0.0, %v302
    %304 = vmatmul.f32.gmra.mxu0 %v253
    %v305 = vpop.f32.mrf.mxu0
    %v306 = vadd.f32 0.0, %v305
    %307 = vmatmul.f32.gmra.mxu0 %v256
    %v308 = vpop.f32.mrf.mxu0
    %v309 = vadd.f32 0.0, %v308
    %310 = vmatmul.f32.gmra.mxu0 %v259
    %v311 = vpop.f32.mrf.mxu0
    %v312 = vadd.f32 0.0, %v311
    %313 = vmatmul.f32.gmra.mxu0 %v262
    %v314 = vpop.f32.mrf.mxu0
    %v315 = vadd.f32 0.0, %v314
    %316 = vmatmul.f32.gmra.mxu0 %v265
    %v317 = vpop.f32.mrf.mxu0
    %v318 = vadd.f32 0.0, %v317
    %319 = vdwg.mxu0
    %v320 = vlaneseq
    %v321 = vand.u32 %v320, 127
    %vm322 = vcmp.lt.s32.totalorder %v321, 16
    %v323 = vsel %vm322, %v99, 0.0
    %v324 = vsel %vm322, %v102, 0.0
    %v325 = vsel %vm322, %v105, 0.0
    %v326 = vsel %vm322, %v108, 0.0
    %v327 = vsel %vm322, %v111, 0.0
    %v328 = vsel %vm322, %v114, 0.0
    %v329 = vsel %vm322, %v117, 0.0
    %v330 = vsel %vm322, %v120, 0.0
    %v331 = vsel %vm322, %v123, 0.0
    %v332 = vsel %vm322, %v126, 0.0
    %v333 = vsel %vm322, %v129, 0.0
    %v334 = vsel %vm322, %v132, 0.0
    %v335 = vadd.f32 %v323, %v285
    %v336 = vadd.f32 %v324, %v288
    %v337 = vadd.f32 %v325, %v291
    %v338 = vadd.f32 %v326, %v294
    %v339 = vadd.f32 %v327, %v297
    %v340 = vadd.f32 %v328, %v300
    %v341 = vadd.f32 %v329, %v303
    %v342 = vadd.f32 %v330, %v306
    %v343 = vadd.f32 %v331, %v309
    %v344 = vadd.f32 %v332, %v312
    %v345 = vadd.f32 %v333, %v315
    %v346 = vadd.f32 %v334, %v318
    %v347 = vld [vmem:[%s1] sm:$0xff]
    %v348 = vld [vmem:[%s1 + $0x8] sm:$0xff]
    %v349 = vld [vmem:[%s1 + $0x10] sm:$0xff]
    %v350 = vld [vmem:[%s1 + $0x18] sm:$0xff]
    %v351 = vld [vmem:[%s1 + $0x20] sm:$0xff]
    %v352 = vld [vmem:[%s1 + $0x28] sm:$0xff]
    %v353 = vld [vmem:[%s1 + $0x30] sm:$0xff]
    %v354 = vld [vmem:[%s1 + $0x38] sm:$0xff]
    %v355 = vld [vmem:[%s1 + $0x40] sm:$0xff]
    %v356 = vld [vmem:[%s1 + $0x48] sm:$0xff]
    %v357 = vld [vmem:[%s1 + $0x50] sm:$0xff]
    %v358 = vld [vmem:[%s1 + $0x58] sm:$0xff]
    %v359 = vadd.f32 %v335, %v347
    %v360 = vadd.f32 %v336, %v348
    %v361 = vadd.f32 %v337, %v349
    %v362 = vadd.f32 %v338, %v350
    %v363 = vadd.f32 %v339, %v351
    %v364 = vadd.f32 %v340, %v352
    %v365 = vadd.f32 %v341, %v353
    %v366 = vadd.f32 %v342, %v354
    %v367 = vadd.f32 %v343, %v355
    %v368 = vadd.f32 %v344, %v356
    %v369 = vadd.f32 %v345, %v357
    %v370 = vadd.f32 %v346, %v358
    %371 = vst [vmem:[#allocation2] sm:$0xff] %v359
    %372 = vst [vmem:[#allocation2 + $0x8] sm:$0xff] %v360
    %373 = vst [vmem:[#allocation2 + $0x10] sm:$0xff] %v361
    %374 = vst [vmem:[#allocation2 + $0x18] sm:$0xff] %v362
    %375 = vst [vmem:[#allocation2 + $0x20] sm:$0xff] %v363
    %376 = vst [vmem:[#allocation2 + $0x28] sm:$0xff] %v364
    %377 = vst [vmem:[#allocation2 + $0x30] sm:$0xff] %v365
    %378 = vst [vmem:[#allocation2 + $0x38] sm:$0xff] %v366
    %379 = vst [vmem:[#allocation2 + $0x40] sm:$0xff] %v367
    %380 = vst [vmem:[#allocation2 + $0x48] sm:$0xff] %v368
    %381 = vst [vmem:[#allocation2 + $0x50] sm:$0xff] %v369
    %382 = vst [vmem:[#allocation2 + $0x58] sm:$0xff] %v370
    // Predicated region
    $region26: #{tpu_custom_call.1} parent=1 // pred_check
      _
    $region27: #{tpu_custom_call.1} parent=1 // pred_check_branch
      %384 = sbr.rel (0) target = $region29
    $region28: #{tpu_custom_call.1} parent=1 // pred_region
      %386 = vsyncadd [#allocation3], 0
      %s387 = sshll.u32 [#allocation2], 4
      %s388 = int_to_ptr.vmem [resolvable:$true] %s387
      %s389 = sshll.u32 %s6, 4
      %s390 = int_to_ptr.hbm [resolvable:$true] %s389
      %395 = dma.vmem_to_hbm [thread:$0]  %s388, 1536, %s390, [#allocation3], 128, 128, 8
    $region29: #{tpu_custom_call.1} parent=1 // pred_fallthru
      _
    // Predicated region
    $region30: #{tpu_custom_call.1} parent=1 // pred_check
      _
    $region31: #{tpu_custom_call.1} parent=1 // pred_check_branch
      %397 = sbr.rel (0) target = $region33
    $region32: #{tpu_custom_call.1} parent=1 // pred_region
      %399 = dma.done [#allocation3], 1536
    $region33: #{tpu_custom_call.1} parent=1 // pred_fallthru
      _
    %400 = vsyncpa [#allocation3], 1

</llo_original>
